<compile_context>
chip_gen: v5e
topology: v5e:2x2
jax: 0.10.0
libtpu: 0.0.40
codegen_flags: <defaults>
</compile_context>

<pallas_src>
import functools

import jax
import jax.numpy as jnp
from jax.experimental import pallas as pl
from jax.experimental.pallas import tpu as pltpu


def _l2n_kernel(x_ref, o_ref, *, eps):
    # x_ref / o_ref view: (BN, C, HW_TILE)
    x_nat = x_ref[...]
    xf = x_nat.astype(jnp.float32)
    # sum of squares over channel axis (axis=1), keepdims for broadcasting
    sq_sum = jnp.sum(xf * xf, axis=1, keepdims=True)        # (BN, 1, HW_TILE) f32
    # one exact reciprocal per spatial column (C x fewer divides), then mul
    inv = 1.0 / (jnp.sqrt(sq_sum) + eps)                     # (BN, 1, HW_TILE) f32
    if o_ref.dtype == jnp.float32:
        # exact f32 multiply for f32 outputs (keeps 1e-5 tolerance)
        o_ref[...] = xf * inv
    else:
        # bf16 (or other low-precision) output: do the full-tensor broadcast
        # multiply in the native dtype; rounding is within output precision.
        o_ref[...] = (x_nat * inv.astype(o_ref.dtype)).astype(o_ref.dtype)


def _pick_tiles(N, C, HW, itemsize):
    """Pick (bn, hw_tile) so one block's full VMEM working set stays small."""
    # Per-block-element cost: 2x double-buffered input + 2x double-buffered
    # output in native dtype, plus ~3 f32-sized kernel temporaries
    # (f32 upcast, x*x, product).
    bytes_per_elem = 4 * itemsize + 3 * 4
    budget = 12 << 20                                  # ~12 MiB working set
    max_elems = max(budget // bytes_per_elem, C * 128)  # always allow >=128 lanes

    # 1) hw_tile: prefer fully-contiguous rows (hw_tile == HW) when one
    #    (1, C, HW) slab respects the budget; otherwise the largest
    #    lane-dense (multiple of 128) divisor of HW that fits.
    if C * HW <= max_elems:
        hw_tile = HW
    else:
        hw_tile = None
        for cand in range(HW - (HW % 128), 127, -128):
            if cand > 0 and HW % cand == 0 and C * cand <= max_elems:
                hw_tile = cand
                break
        if hw_tile is None:
            # No lane-dense divisor fits the budget; take the smallest
            # lane-dense divisor (or full extent) and let vmem_limit_bytes
            # absorb the larger block.
            hw_tile = HW
            for cand in range(128, HW, 128):
                if HW % cand == 0:
                    hw_tile = cand
                    break

    # 2) bn: largest divisor of N keeping the joint block within budget.
    bn = 1
    for cand in range(1, N + 1):
        if N % cand == 0 and cand * C * hw_tile <= max_elems:
            bn = cand

    # 3) v7x megacore: ensure >= 2 grid steps along a parallel axis when
    #    possible so both TensorCores get work.
    if (N // bn) * (HW // hw_tile) < 2:
        if N > 1:
            bn = max(d for d in range(1, N // 2 + 1) if N % d == 0)
        elif hw_tile == HW and HW % 256 == 0:
            hw_tile = HW // 2

    return bn, hw_tile


def l2n_pallas(x, eps=1e-6):
    """x: (N, C, H, W) array. Returns x / (||x||_2 over C + eps)."""
    N, C, H, W = x.shape
    HW = H * W
    x3 = x.reshape(N, C, HW)
    itemsize = jnp.dtype(x.dtype).itemsize

    bn, hw_tile = _pick_tiles(N, C, HW, itemsize)
    grid = (N // bn, HW // hw_tile)

    # Explicit scoped-VMEM sizing from the actual working set:
    #   4 double-buffers (in + out) in native dtype + ~3 f32 temps, 2x headroom.
    block_elems = bn * C * hw_tile
    working = 4 * block_elems * itemsize + 3 * block_elems * 4
    vmem_limit = int(min(48 << 20, max(2 * working, 16 << 20)))

    out3 = pl.pallas_call(
        functools.partial(_l2n_kernel, eps=eps),
        out_shape=jax.ShapeDtypeStruct((N, C, HW), x.dtype),
        grid_spec=pltpu.PrefetchScalarGridSpec(
            num_scalar_prefetch=0,
            grid=grid,
            in_specs=[
                pl.BlockSpec((bn, C, hw_tile), lambda n, t: (n, 0, t)),
            ],
            out_specs=pl.BlockSpec((bn, C, hw_tile), lambda n, t: (n, 0, t)),
        ),
        compiler_params=pltpu.CompilerParams(
            dimension_semantics=("parallel", "parallel"),
            vmem_limit_bytes=vmem_limit,
        ),
    )(x3)

    return out3.reshape(N, C, H, W)


def l2n_ref(x, eps=1e-6):
    norm = jnp.sqrt(jnp.sum(x.astype(jnp.float32) ** 2, axis=1, keepdims=True))
    return (x.astype(jnp.float32) / (norm + eps)).astype(x.dtype)


if __name__ == "__main__":
    key = jax.random.PRNGKey(0)
    x = jax.random.normal(key, (2, 4, 16, 16), dtype=jnp.float32)

    y = l2n_pallas(x, eps=1e-6)
    jax.block_until_ready(y)

    y_ref = l2n_ref(x, eps=1e-6)
    assert y.shape == x.shape and y.dtype == x.dtype
    assert jnp.allclose(y, y_ref, atol=1e-5, rtol=1e-5)

    print("KERNEL_OK")
</pallas_src>

<mosaic_0001>
module attributes {stable_mosaic.version = 11 : i64} {
  func.func @_l2n_kernel(%arg0: i32, %arg1: i32, %arg2: memref<1x4x256xf32, #tpu.memory_space<vmem>>, %arg3: memref<1x4x256xf32, #tpu.memory_space<vmem>>) attributes {dimension_semantics = [#tpu.dimension_semantics<parallel>, #tpu.dimension_semantics<parallel>], iteration_bounds = array<i64: 2, 1>, scalar_prefetch = 0 : i64, scratch_operands = 0 : i64, tpu.core_type = #tpu.core_type<tc>, window_params = [{transform_indices = @transform_0, window_bounds = array<i64: 1, 4, 256>}, {transform_indices = @transform_1, window_bounds = array<i64: 1, 4, 256>}]} {
    %c0 = arith.constant 0 : index
    %c0_0 = arith.constant 0 : index
    %c0_1 = arith.constant 0 : index
    %0 = vector.load %arg2[%c0, %c0_0, %c0_1] : memref<1x4x256xf32, #tpu.memory_space<vmem>>, vector<1x4x256xf32>
    %1 = arith.mulf %0, %0 : vector<1x4x256xf32>
    %cst = arith.constant dense<0.000000e+00> : vector<1x256xf32>
    %2 = vector.multi_reduction <add>, %1, %cst [1] : vector<1x4x256xf32> to vector<1x256xf32>
    %3 = vector.shape_cast %2 : vector<1x256xf32> to vector<1x1x256xf32>
    %4 = math.sqrt %3 : vector<1x1x256xf32>
    %cst_2 = arith.constant 9.99999997E-7 : f32
    %5 = vector.broadcast %cst_2 : f32 to vector<1x1x256xf32>
    %6 = arith.addf %4, %5 : vector<1x1x256xf32>
    %cst_3 = arith.constant 1.000000e+00 : f32
    %7 = vector.broadcast %cst_3 : f32 to vector<1x1x256xf32>
    %8 = arith.divf %7, %6 : vector<1x1x256xf32>
    %9 = vector.broadcast %8 : vector<1x1x256xf32> to vector<1x4x256xf32>
    %10 = arith.mulf %0, %9 : vector<1x4x256xf32>
    %c0_4 = arith.constant 0 : index
    %c0_5 = arith.constant 0 : index
    %c0_6 = arith.constant 0 : index
    %11 = vector.load %arg3[%c0_4, %c0_5, %c0_6] : memref<1x4x256xf32, #tpu.memory_space<vmem>>, vector<1x4x256xf32>
    tpu.vector_store %arg3[%c0_4, %c0_5, %c0_6], %10 {strides = array<i32>} : memref<1x4x256xf32, #tpu.memory_space<vmem>>, vector<1x4x256xf32>,
    return
  }
  func.func @transform_0(%arg0: i32, %arg1: i32) -> (i32, i32, i32) {
    %c0_i32 = arith.constant 0 : i32
    %c0_i32_0 = arith.constant 0 : i32
    return %arg0, %c0_i32, %arg1 : i32, i32, i32
  }
  func.func @transform_1(%arg0: i32, %arg1: i32) -> (i32, i32, i32) {
    %c0_i32 = arith.constant 0 : i32
    %c0_i32_0 = arith.constant 0 : i32
    return %arg0, %c0_i32, %arg1 : i32, i32, i32
  }
}

</mosaic_0001>

<llo_original>
// kernel: tpu_custom_call.1
$region0: #{tpu_custom_call.1}
  #allocation0 [shape = 'u32[]', space=smem, size = 0x4, offset = 0x4, fixed_abs, tag = 'smem constant byte address 0x4 - core index']
  #allocation1 [shape = 'u32[72,128]{1,0:T(1,128)}', space=vmem, size = 0x9000, scoped, tag = 'internal scratch']
  %s0 = inlined_call_operand.hbm [shape: f32[2,4,256], index: 0, kind: input, shape index: {}]
  %s1 = inlined_call_operand.hbm [shape: f32[2,4,256], index: 1, kind: output, shape index: {}]
  %s2 = sld [smem:[#allocation0]]
  $region41: #{tpu_custom_call.1} parent=0
    _
  %s4 = ssub.s32 1, %s2
  %s5 = scalar_select 0, %s4, %s2
  $region1: #{tpu_custom_call.1} parent=0
    #allocation2 [shape = 'u8[8192]{0}', space=vmem, size = 0x2000, scoped, tag = 'input window, operand 0']
    #allocation3 [shape = 's32[2]{0}', space=sflag, size = 0x8, scoped, tag = 'scoped memory for tpu_custom_call.1']
    #allocation4 [shape = 's32[2]{0}', space=sflag, size = 0x8, scoped, tag = 'scoped memory for tpu_custom_call.1']
    #allocation5 [shape = 'u8[8192]{0}', space=vmem, size = 0x2000, scoped, tag = 'output window, operand 0']
    %6 = vsyncpa [#allocation3], 0
    %s7 = scalar_lea.sflag [#allocation3], 1
    %8 = vsyncpa %s7, 0
    %9 = vsyncpa [#allocation4], 0
    %s10 = scalar_lea.sflag [#allocation4], 1
    %11 = vsyncpa %s10, 0
    loop: start=0, step=1, limit=4
    $region2: #{tpu_custom_call.1} parent=1 // loop_pre_header
      _
    $region3: #{tpu_custom_call.1} parent=1 // loop_header
      %s13 = sphi 0, %s17
      %p14 = scmp.ge.s32.totalorder %s13, 4
      %s20 = sphi 0, %s32
      %s21 = sphi 0, %s28
      %s22 = sphi 0, %s20
      %s23 = sphi 0, %s21
      %s24 = sphi 0, %s22
      %s25 = sphi 0, %s23
      %s37 = sphi 0, %s39
      %s40 = sphi 0, %s37
      %s41 = sphi 0, %s40
      %s57 = sphi 0, %s41
      %s65 = sphi 0, %s67
      %s68 = sphi 0, %s65
      %s69 = sphi 0, %s68
      %s85 = sphi 0, %s69
    $region4: #{tpu_custom_call.1} parent=1 // loop_header_branch
      %16 = sbr.rel (%p14) target = $region8
    $region5: #{tpu_custom_call.1} parent=1 // loop_body
      %s18 = ssub.s32 %s13, 1
      %s19 = ssub.s32 %s13, 2
      %s26 = sadd.s32 1, %s21
      %p27 = scmp.ge.s32.totalorder %s26, 1
      %s28 = scalar_select %p27, 0, %s26
      %s29 = sadd.s32 1, %s20
      %s30 = scalar_select %p27, %s29, %s20
      %p31 = scmp.ge.s32.totalorder %s30, 2
      %s32 = scalar_select %p31, 0, %s30
      %s33 = ssub.s32 %s20, %s32
      %s34 = ssub.s32 %s21, %s28
      %s35 = sor.u32 %s33, %s34
      %p36 = scmp.eq.s32.totalorder %s35, 0
      %s38 = sadd.s32 %s37, 1
      %s39 = scalar_select %p36, %s37, %s38
      %p42 = pneg %p36
      %p43 = scmp.eq.s32.totalorder %s13, 1
      %p44 = por %p42, %p43
      %p45 = scmp.ne.s32.totalorder %s37, %s40
      %p46 = scmp.eq.s32.totalorder %s13, 0
      %p47 = por %p45, %p46
      %p48 = scmp.ne.s32.totalorder %s37, %s40
      %p49 = scmp.eq.s32.totalorder %s18, 1
      %p50 = por %p48, %p49
      %p51 = scmp.ne.s32.totalorder %s40, %s41
      %p52 = scmp.eq.s32.totalorder %s18, 0
      %p53 = por %p51, %p52
      %p54 = scmp.ne.s32.totalorder %s40, %s41
      %p55 = scmp.eq.s32.totalorder %s19, 1
      %p56 = por %p54, %p55
      %p58 = scmp.ne.s32.totalorder %s41, %s57
      %p59 = scmp.eq.s32.totalorder %s19, 0
      %p60 = por %p58, %p59
      %s61 = ssub.s32 %s20, %s32
      %s62 = ssub.s32 %s21, %s28
      %s63 = sor.u32 %s61, %s62
      %p64 = scmp.eq.s32.totalorder %s63, 0
      %s66 = sadd.s32 %s65, 1
      %s67 = scalar_select %p64, %s65, %s66
      %p70 = pneg %p64
      %p71 = scmp.eq.s32.totalorder %s13, 1
      %p72 = por %p70, %p71
      %p73 = scmp.ne.s32.totalorder %s65, %s68
      %p74 = scmp.eq.s32.totalorder %s13, 0
      %p75 = por %p73, %p74
      %p76 = scmp.ne.s32.totalorder %s65, %s68
      %p77 = scmp.eq.s32.totalorder %s18, 1
      %p78 = por %p76, %p77
      %p79 = scmp.ne.s32.totalorder %s68, %s69
      %p80 = scmp.eq.s32.totalorder %s18, 0
      %p81 = por %p79, %p80
      %p82 = scmp.ne.s32.totalorder %s68, %s69
      %p83 = scmp.eq.s32.totalorder %s19, 1
      %p84 = por %p82, %p83
      %p86 = scmp.ne.s32.totalorder %s69, %s85
      %p87 = scmp.eq.s32.totalorder %s19, 0
      %p88 = por %p86, %p87
      %p89 = scmp.le.s32.totalorder 1, %s13
      %p90 = scmp.lt.s32.totalorder %s13, 3
      %p91 = pnand %p89, %p90
      %p92 = pneg %p91
      // Predicated region
      $region9: #{tpu_custom_call.1} parent=5 // pred_check
        _
      $region10: #{tpu_custom_call.1} parent=5 // pred_check_branch
        %94 = sbr.rel (%p91) target = $region12
      $region11: #{tpu_custom_call.1} parent=5 // pred_region
        %s95 = ssub.s32 %s13, 1
      $region12: #{tpu_custom_call.1} parent=5 // pred_fallthru
        _
      %p96 = scmp.lt.s32.totalorder %s13, 2
      // Predicated region
      $region13: #{tpu_custom_call.1} parent=5 // pred_check
        %p97 = pneg %p96
      $region14: #{tpu_custom_call.1} parent=5 // pred_check_branch
        %99 = sbr.rel (%p97) target = $region16
      $region15: #{tpu_custom_call.1} parent=5 // pred_region
        // Predicated region
        $region17: #{tpu_custom_call.1} parent=15 // pred_check
          %p100 = pneg %p47
        $region18: #{tpu_custom_call.1} parent=15 // pred_check_branch
          %102 = sbr.rel (%p100) target = $region20
        $region19: #{tpu_custom_call.1} parent=15 // pred_region
          %s103 = sand.u32 %s37, 1
          %s104 = scalar_lea.sflag [#allocation3], %s103
          %s105 = sand.u32 %s37, 1
          %s106 = smul.addr %s105, 8
          %s107 = scalar_lea.vmem [#allocation2], %s106
          %s108 = smul.u32 2, %s21
          %110 = vsyncadd %s104, 0
          %s111 = smul.addr %s20, 2
          %s112 = sadd.s32 %s108, %s111
          %s113 = smul.addr %s112, 4
          %s114 = scalar_lea.hbm %s0, %s113
          %s116 = sshll.u32 %s114, 4
          %s117 = int_to_ptr.hbm [resolvable:$true] %s116
          %s118 = sshll.u32 %s107, 4
          %s119 = int_to_ptr.vmem [resolvable:$true] %s118
          %121 = dma.hbm_to_vmem [thread:$0]  %s117, 128, %s119, %s104
        $region20: #{tpu_custom_call.1} parent=15 // pred_fallthru
          _
      $region16: #{tpu_custom_call.1} parent=5 // pred_fallthru
        _
      %p122 = scmp.le.s32.totalorder 1, %s13
      %p123 = scmp.lt.s32.totalorder %s13, 3
      %p124 = pnand %p122, %p123
      %p125 = pneg %p124
      // Predicated region
      $region21: #{tpu_custom_call.1} parent=5 // pred_check
        _
      $region22: #{tpu_custom_call.1} parent=5 // pred_check_branch
        %127 = sbr.rel (%p124) target = $region24
      $region23: #{tpu_custom_call.1} parent=5 // pred_region
        %s128 = ssub.s32 %s13, 1
        %s129 = sand.u32 %s40, 1
        %s130 = scalar_lea.sflag [#allocation3], %s129
        %s131 = sand.u32 %s40, 1
        %s132 = smul.addr %s131, 8
        %s133 = scalar_lea.vmem [#allocation2], %s132
        // Predicated region
        $region25: #{tpu_custom_call.1} parent=23 // pred_check
          %p134 = pneg %p53
        $region26: #{tpu_custom_call.1} parent=23 // pred_check_branch
          %136 = sbr.rel (%p134) target = $region28
        $region27: #{tpu_custom_call.1} parent=23 // pred_region
          %138 = dma.done %s130, 128
        $region28: #{tpu_custom_call.1} parent=23 // pred_fallthru
          _
        %s139 = sand.u32 %s40, 1
        %s140 = scalar_lea.sflag [#allocation3], %s139
        %s141 = sand.u32 %s40, 1
        %s142 = smul.addr %s141, 8
        %s143 = scalar_lea.vmem [#allocation2], %s142
        %p144 = pneg %p53
        %p145 = pneg %p50
        %p146 = pneg %p81
        %p147 = pneg %p78
        %s148 = sand.u32 %s68, 1
        %s149 = scalar_lea.sflag [#allocation4], %s148
        %s150 = sand.u32 %s68, 1
        %s151 = smul.addr %s150, 8
        %s152 = scalar_lea.vmem [#allocation5], %s151
        %s153 = smul.u32 2, %s23
        %s154 = smul.u32 2, %s23
        %v155 = vld [vmem:[%s133] sm:$0xff]
        %v156 = vmul.f32 %v155, %v155
        %158 = vst [vmem:[#allocation1] ss:$2 sm:$0xff] %v156
        %v159 = vld.sshfl [vmem:[#allocation1] sm:$0xff pattern:$0x75316420]
        %v160 = vld.sshfl [vmem:[#allocation1 + $0x8] sm:$0xff pattern:$0x75316420]
        %vm163 = vcmask 1043456
        %v164 = vsel %vm163, %v159, 0.0
        %v165 = vrot.slane %v164, 4
        %v166 = vadd.f32 %v164, %v165
        %v167 = vrot.slane %v166, 2
        %v168 = vadd.f32 %v166, %v167
        %v169 = vrot.slane %v168, 1
        %v170 = vadd.f32 %v168, %v169
        %v171 = vsel %vm163, %v160, 0.0
        %v172 = vrot.slane %v171, 4
        %v173 = vadd.f32 %v171, %v172
        %v174 = vrot.slane %v173, 2
        %v175 = vadd.f32 %v173, %v174
        %v176 = vrot.slane %v175, 1
        %v177 = vadd.f32 %v175, %v176
        %v178 = vrsqrt.pop %v170
        %v179 = vmul.f32 %v178, %v170
        %v180 = vmul.f32 %v179, %v178
        %v181 = vmul.f32 0.5, %v180
        %v182 = vsub.f32 1.5, %v181
        %v183 = vmul.f32 %v178, %v182
        %v184 = vmul.f32 %v170, %v183
        %vm185 = vcmp.eq.f32.partialorder %v170, inf
        %v186 = vsel %vm185, %v170, %v184
        %vm187 = vcmp.eq.f32.partialorder %v170, 0.0
        %v188 = vand.u32 %v170, 2147483648
        %v189 = vsel %vm187, %v188, %v186
        %v190 = vrsqrt.pop %v177
        %v191 = vmul.f32 %v190, %v177
        %v192 = vmul.f32 %v191, %v190
        %v193 = vmul.f32 0.5, %v192
        %v194 = vsub.f32 1.5, %v193
        %v195 = vmul.f32 %v190, %v194
        %v196 = vmul.f32 %v177, %v195
        %vm197 = vcmp.eq.f32.partialorder %v177, inf
        %v198 = vsel %vm197, %v177, %v196
        %vm199 = vcmp.eq.f32.partialorder %v177, 0.0
        %v200 = vand.u32 %v177, 2147483648
        %v201 = vsel %vm199, %v200, %v198
        %v202 = vadd.f32 %v189, 1e-06
        %v203 = vadd.f32 %v201, 1e-06
        %v204 = vrcp.pop %v202
        %v205 = vmul.f32 %v202, %v204
        %v206 = vsub.f32 1.0, %v205
        %v207 = vmul.f32 %v204, %v206
        %v208 = vadd.f32 %v204, %v207
        %vm209 = vweird.f32 %v202
        %vm210 = vweird.f32 %v204
        %vm211 = vmor %vm209, %vm210
        %v212 = vsel %vm211, %v204, %v208
        %v213 = vand.u32 2147483647, %v202
        %vm214 = vcmp.eq.f32.partialorder %v213, 8.507059e+37
        %v215 = vand.u32 %v202, 2147483648
        %v216 = vor.u32 1.1754944e-38, %v215
        %v217 = vsel %vm214, %v216, %v212
        %v218 = vmul.f32 1.0, %v217
        %v219 = vrcp.pop %v203
        %v220 = vmul.f32 %v203, %v219
        %v221 = vsub.f32 1.0, %v220
        %v222 = vmul.f32 %v219, %v221
        %v223 = vadd.f32 %v219, %v222
        %vm224 = vweird.f32 %v203
        %vm225 = vweird.f32 %v219
        %vm226 = vmor %vm224, %vm225
        %v227 = vsel %vm226, %v219, %v223
        %v228 = vand.u32 2147483647, %v203
        %vm229 = vcmp.eq.f32.partialorder %v228, 8.507059e+37
        %v230 = vand.u32 %v203, 2147483648
        %v231 = vor.u32 1.1754944e-38, %v230
        %v232 = vsel %vm229, %v231, %v227
        %v233 = vmul.f32 1.0, %v232
        %v236 = vrot.slane %v233, 4
        %v237 = vsel %vm163, %v218, %v236
        %v239 = vmul.f32 %v155, %v237
        %240 = vst [vmem:[%s152] sm:$0xff] %v239
        %s241 = sand.u32 %s68, 1
        %s242 = scalar_lea.sflag [#allocation4], %s241
        %s243 = sand.u32 %s68, 1
        %s244 = smul.addr %s243, 8
        %s245 = scalar_lea.vmem [#allocation5], %s244
        // Predicated region
        $region29: #{tpu_custom_call.1} parent=23 // pred_check
          %p246 = pneg %p78
        $region30: #{tpu_custom_call.1} parent=23 // pred_check_branch
          %248 = sbr.rel (%p246) target = $region32
        $region31: #{tpu_custom_call.1} parent=23 // pred_region
          %s249 = smul.u32 2, %s23
          %251 = vsyncadd %s242, 0
          %s252 = smul.addr %s22, 2
          %s253 = sadd.s32 %s249, %s252
          %s254 = smul.addr %s253, 4
          %s255 = scalar_lea.hbm %s1, %s254
          %s257 = sshll.u32 %s245, 4
          %s258 = int_to_ptr.vmem [resolvable:$true] %s257
          %s259 = sshll.u32 %s255, 4
          %s260 = int_to_ptr.hbm [resolvable:$true] %s259
          %262 = dma.vmem_to_hbm [thread:$0]  %s258, 128, %s260, %s242
        $region32: #{tpu_custom_call.1} parent=23 // pred_fallthru
          _
      $region24: #{tpu_custom_call.1} parent=5 // pred_fallthru
        _
      %p263 = scmp.le.s32.totalorder 2, %s13
      // Predicated region
      $region33: #{tpu_custom_call.1} parent=5 // pred_check
        %p264 = pneg %p263
      $region34: #{tpu_custom_call.1} parent=5 // pred_check_branch
        %266 = sbr.rel (%p264) target = $region36
      $region35: #{tpu_custom_call.1} parent=5 // pred_region
        %s267 = ssub.s32 %s13, 2
        // Predicated region
        $region37: #{tpu_custom_call.1} parent=35 // pred_check
          %p268 = pneg %p84
        $region38: #{tpu_custom_call.1} parent=35 // pred_check_branch
          %270 = sbr.rel (%p268) target = $region40
        $region39: #{tpu_custom_call.1} parent=35 // pred_region
          %s271 = sand.u32 %s69, 1
          %s272 = scalar_lea.sflag [#allocation4], %s271
          %s273 = sand.u32 %s69, 1
          %s274 = smul.addr %s273, 8
          %s275 = scalar_lea.vmem [#allocation5], %s274
          %277 = dma.done %s272, 128
        $region40: #{tpu_custom_call.1} parent=35 // pred_fallthru
          _
      $region36: #{tpu_custom_call.1} parent=5 // pred_fallthru
        _
    $region6: #{tpu_custom_call.1} parent=1 // loop_footer
      %s17 = sadd.s32 1, %s13
    $region7: #{tpu_custom_call.1} parent=1 // loop_footer_branch
      %12 = sbr.rel target = $region3
    $region8: #{tpu_custom_call.1} parent=1 // loop_exit
      _
    %278 = vsyncpa [#allocation3], 1
    %s279 = scalar_lea.sflag [#allocation3], 1
    %280 = vsyncpa %s279, 1
    %281 = vsyncpa [#allocation4], 1
    %s282 = scalar_lea.sflag [#allocation4], 1
    %283 = vsyncpa %s282, 1

</llo_original>
